<compile_context>
chip_gen: v6e
topology: v6e:2x2x1
jax: 0.10.0
libtpu: 0.0.40
codegen_flags: <defaults>
</compile_context>

<pallas_src>
import jax
import jax.numpy as jnp
from jax.experimental import pallas as pl
from jax.experimental.pallas import tpu as pltpu


def _round_up(x, m):
    return (x + m - 1) // m * m


def v_kernel(h_ref, hh_ref, ca_ref, w_ref, b_ref, o_ref):
    h_aug = h_ref[...]        # [TB, L+2]   == [h | ||h||^2 | 1]
    hh = hh_ref[...]          # [1, TB]     == ||h||^2 (lane-dense row)
    ca = ca_ref[...]          # [N_pad, L+2] == [-2*s*c | s | s*cc] (0 on padded rows)
    w = w_ref[...]            # [1, N_pad]  == lin1 weight, 0 on padded cols
    b = b_ref[0, 0]           # scalar bias from SMEM

    # One MXU pass gives s*r = s*||h||^2 - 2*s*(c.h) + s*||c||^2 directly.
    g = jax.lax.dot_general(
        ca, h_aug, (((1,), (1,)), ((), ())),
        preferred_element_type=jnp.float32)                       # [N_pad, TB]

    # Multiquadric RBF (clamp guards the cancellation in the expansion).
    phi = jnp.sqrt(1.0 + jnp.maximum(g, 0.0))                     # [N_pad, TB]

    # Linear(N -> 1) as an MXU matmul: [1, N_pad] @ [N_pad, TB] -> [1, TB].
    y = jnp.dot(w, phi, preferred_element_type=jnp.float32) + b

    # tanh(y) + 0.5*||h||^2, written as a lane-dense [1, TB] row.
    o_ref[...] = jnp.tanh(y) + 0.5 * hh


def v_forward(h, centres, log_sigmas, lin_w, lin_b, *, block_b=None):
    """h: [B, L] float32 -> [B, 1] float32."""
    h = jnp.asarray(h, jnp.float32)
    B, L = h.shape
    N = centres.shape[0]

    # Basis count padded only to the sublane granule (8).
    N_pad = _round_up(max(N, 8), 8)

    # Batch tile: multiple of 128 lanes; default aims for >= 2 grid steps
    # (so v7x can shard the parallel batch axis across both TCs), capped at
    # 2048 to bound VMEM while keeping per-step overhead small.
    if block_b is None:
        block_b = min(2048, max(128, _round_up(pl.cdiv(B, 2), 128)))
    block_b = _round_up(block_b, 128)
    B_pad = _round_up(B, block_b)
    num_tiles = B_pad // block_b

    # ---- Parameter prep (done once, outside the kernel hot loop). ----------
    c = jnp.asarray(centres, jnp.float32)                          # [N, L]
    s = jnp.exp(jnp.asarray(log_sigmas, jnp.float32))              # [N]
    cc = jnp.sum(c * c, axis=-1)                                   # [N]

    # Augmented parameter slab: [-2*s*c | s | s*cc]; padded rows stay all-zero
    # so padded bases yield g=0 -> phi=1 and are killed by the zero weights.
    ca = jnp.zeros((N_pad, L + 2), jnp.float32)
    ca = ca.at[:N, :L].set(-2.0 * s[:, None] * c)
    ca = ca.at[:N, L].set(s)
    ca = ca.at[:N, L + 1].set(s * cc)

    w = jnp.zeros((1, N_pad), jnp.float32).at[0, :N].set(
        jnp.asarray(lin_w, jnp.float32).reshape(-1))               # [1, N_pad]
    b = jnp.asarray(lin_b, jnp.float32).reshape(1, 1)              # [1, 1] (SMEM)

    # ---- Input prep: augmented h and lane-dense ||h||^2 row. ---------------
    hh = jnp.sum(h * h, axis=-1)                                   # [B]
    h_aug = jnp.zeros((B_pad, L + 2), jnp.float32)
    h_aug = h_aug.at[:B, :L].set(h)
    h_aug = h_aug.at[:B, L].set(hh)
    h_aug = h_aug.at[:B, L + 1].set(1.0)
    hh_row = jnp.zeros((1, B_pad), jnp.float32).at[0, :B].set(hh)  # [1, B_pad]

    out = pl.pallas_call(
        v_kernel,
        out_shape=jax.ShapeDtypeStruct((1, B_pad), jnp.float32),
        grid=(num_tiles,),
        in_specs=[
            pl.BlockSpec((block_b, L + 2), lambda i: (i, 0)),      # h_aug tile
            pl.BlockSpec((1, block_b), lambda i: (0, i)),          # ||h||^2 row
            pl.BlockSpec((N_pad, L + 2), lambda i: (0, 0)),        # param slab
            pl.BlockSpec((1, N_pad), lambda i: (0, 0)),            # lin1 weight
            pl.BlockSpec(memory_space=pltpu.MemorySpace.SMEM),     # bias scalar
        ],
        out_specs=pl.BlockSpec((1, block_b), lambda i: (0, i)),
        compiler_params=pltpu.CompilerParams(
            dimension_semantics=("parallel",),
        ),
    )(h_aug, hh_row, ca, w, b)

    return out.reshape(B_pad)[:B][:, None]


def v_reference(h, centres, log_sigmas, lin_w, lin_b):
    R = h[:, None, :] - centres[None, :, :]
    r = jnp.sum(R ** 2, axis=-1)
    phi = jnp.sqrt(1.0 + r * jnp.exp(log_sigmas)[None, :])
    y = phi @ lin_w.reshape(-1, 1) + lin_b.reshape(1, 1)
    return jnp.tanh(y) + 0.5 * jnp.sum(h ** 2, axis=-1, keepdims=True)


if __name__ == "__main__":
    latent_size = 32
    num_basis_function = 64
    batch = 8

    key = jax.random.PRNGKey(0)
    k_h, k_c, k_w, k_b, k_h2 = jax.random.split(key, 5)

    # Deterministic parameter init (shapes from the module __init__):
    #   RBF.centres      : [num_basis_function, latent_size]  ~ N(0, 1)
    #   RBF.log_sigmas   : [num_basis_function]               = 0
    #   lin1.weight      : [1, num_basis_function]            ~ U(-1/sqrt(N), 1/sqrt(N))
    #   lin1.bias        : [1]                                ~ U(-1/sqrt(N), 1/sqrt(N))
    centres = jax.random.normal(k_c, (num_basis_function, latent_size), jnp.float32)
    log_sigmas = jnp.zeros((num_basis_function,), jnp.float32)
    bound = 1.0 / jnp.sqrt(jnp.float32(num_basis_function))
    lin_w = jax.random.uniform(k_w, (1, num_basis_function), jnp.float32, -bound, bound)
    lin_b = jax.random.uniform(k_b, (1,), jnp.float32, -bound, bound)

    # Small-batch path (single grid step).
    h = jax.random.normal(k_h, (batch, latent_size), jnp.float32)
    out = jax.block_until_ready(v_forward(h, centres, log_sigmas, lin_w, lin_b))
    ref = v_reference(h, centres, log_sigmas, lin_w, lin_b)
    assert out.shape == (batch, 1)
    assert jnp.allclose(out, ref, atol=1e-4, rtol=1e-4)

    # Multi-tile path with explicit small blocks (exercises tiling + padding).
    batch2 = 300
    h2 = jax.random.normal(k_h2, (batch2, latent_size), jnp.float32)
    out2 = jax.block_until_ready(
        v_forward(h2, centres, log_sigmas, lin_w, lin_b, block_b=128))
    ref2 = v_reference(h2, centres, log_sigmas, lin_w, lin_b)
    assert out2.shape == (batch2, 1)
    assert jnp.allclose(out2, ref2, atol=1e-4, rtol=1e-4)

    # Default block_b path (>= 2 tiles for B > 128, v7x-friendly).
    out3 = jax.block_until_ready(v_forward(h2, centres, log_sigmas, lin_w, lin_b))
    assert out3.shape == (batch2, 1)
    assert jnp.allclose(out3, ref2, atol=1e-4, rtol=1e-4)

    print("KERNEL_OK")
</pallas_src>

<mosaic_0001>
module attributes {stable_mosaic.version = 11 : i64} {
  func.func @v_kernel(%arg0: i32, %arg1: memref<128x34xf32, #tpu.memory_space<vmem>>, %arg2: memref<1x128xf32, #tpu.memory_space<vmem>>, %arg3: memref<64x34xf32, #tpu.memory_space<vmem>>, %arg4: memref<1x64xf32, #tpu.memory_space<vmem>>, %arg5: memref<1x1xf32, #tpu.memory_space<smem>>, %arg6: memref<1x128xf32, #tpu.memory_space<vmem>>) attributes {dimension_semantics = [#tpu.dimension_semantics<parallel>], iteration_bounds = array<i64: 1>, scalar_prefetch = 0 : i64, scratch_operands = 0 : i64, tpu.core_type = #tpu.core_type<tc>, window_params = [{transform_indices = @transform_0, window_bounds = array<i64: 128, 34>}, {transform_indices = @transform_1, window_bounds = array<i64: 1, 128>}, {pipeline_mode = #tpu.pipeline_mode<synchronous>, transform_indices = @transform_2, window_bounds = array<i64: 64, 34>}, {pipeline_mode = #tpu.pipeline_mode<synchronous>, transform_indices = @transform_3, window_bounds = array<i64: 1, 64>}, {transform_indices = @transform_4, window_bounds = array<i64: 1, 1>}, {transform_indices = @transform_5, window_bounds = array<i64: 1, 128>}]} {
    %c0 = arith.constant 0 : index
    %c0_0 = arith.constant 0 : index
    %0 = vector.load %arg1[%c0, %c0_0] : memref<128x34xf32, #tpu.memory_space<vmem>>, vector<128x34xf32>
    %c0_1 = arith.constant 0 : index
    %c0_2 = arith.constant 0 : index
    %1 = vector.load %arg2[%c0_1, %c0_2] : memref<1x128xf32, #tpu.memory_space<vmem>>, vector<1x128xf32>
    %c0_3 = arith.constant 0 : index
    %c0_4 = arith.constant 0 : index
    %2 = vector.load %arg3[%c0_3, %c0_4] : memref<64x34xf32, #tpu.memory_space<vmem>>, vector<64x34xf32>
    %c0_5 = arith.constant 0 : index
    %c0_6 = arith.constant 0 : index
    %3 = vector.load %arg4[%c0_5, %c0_6] : memref<1x64xf32, #tpu.memory_space<vmem>>, vector<1x64xf32>
    %c0_7 = arith.constant 0 : index
    %c0_8 = arith.constant 0 : index
    %4 = memref.load %arg5[%c0_7, %c0_8] : memref<1x1xf32, #tpu.memory_space<smem>>
    %cst = arith.constant dense<0.000000e+00> : vector<64x128xf32>
    %5 = tpu.matmul %2, %0, %cst {dimension_numbers = #tpu.dot_dimension_numbers<[1], [1], [0], [0], [0, 0, 1, 0], [], []>} : vector<64x34xf32>, vector<128x34xf32>, vector<64x128xf32> -> vector<64x128xf32>
    %cst_9 = arith.constant 0.000000e+00 : f32
    %6 = vector.broadcast %cst_9 : f32 to vector<64x128xf32>
    %7 = arith.maximumf %5, %6 : vector<64x128xf32>
    %cst_10 = arith.constant 1.000000e+00 : f32
    %8 = vector.broadcast %cst_10 : f32 to vector<64x128xf32>
    %9 = arith.addf %8, %7 : vector<64x128xf32>
    %10 = math.sqrt %9 : vector<64x128xf32>
    %cst_11 = arith.constant dense<0.000000e+00> : vector<1x128xf32>
    %11 = tpu.matmul %3, %10, %cst_11 {dimension_numbers = #tpu.dot_dimension_numbers<[1], [0], [0], [1], [0, 0, 1, 1], [], []>} : vector<1x64xf32>, vector<64x128xf32>, vector<1x128xf32> -> vector<1x128xf32>
    %12 = vector.broadcast %4 : f32 to vector<1x128xf32>
    %13 = arith.addf %11, %12 : vector<1x128xf32>
    %14 = math.tanh %13 : vector<1x128xf32>
    %cst_12 = arith.constant 5.000000e-01 : f32
    %15 = vector.broadcast %cst_12 : f32 to vector<1x128xf32>
    %16 = arith.mulf %15, %1 : vector<1x128xf32>
    %17 = arith.addf %14, %16 : vector<1x128xf32>
    %c0_13 = arith.constant 0 : index
    %c0_14 = arith.constant 0 : index
    %18 = vector.load %arg6[%c0_13, %c0_14] : memref<1x128xf32, #tpu.memory_space<vmem>>, vector<1x128xf32>
    tpu.vector_store %arg6[%c0_13, %c0_14], %17 {strides = array<i32>} : memref<1x128xf32, #tpu.memory_space<vmem>>, vector<1x128xf32>,
    return
  }
  func.func @transform_0(%arg0: i32) -> (i32, i32) {
    %c0_i32 = arith.constant 0 : i32
    %c0_i32_0 = arith.constant 0 : i32
    return %arg0, %c0_i32 : i32, i32
  }
  func.func @transform_1(%arg0: i32) -> (i32, i32) {
    %c0_i32 = arith.constant 0 : i32
    %c0_i32_0 = arith.constant 0 : i32
    return %c0_i32, %arg0 : i32, i32
  }
  func.func @transform_2(%arg0: i32) -> (i32, i32) {
    %c0_i32 = arith.constant 0 : i32
    %c0_i32_0 = arith.constant 0 : i32
    %c0_i32_1 = arith.constant 0 : i32
    return %c0_i32, %c0_i32_0 : i32, i32
  }
  func.func @transform_3(%arg0: i32) -> (i32, i32) {
    %c0_i32 = arith.constant 0 : i32
    %c0_i32_0 = arith.constant 0 : i32
    %c0_i32_1 = arith.constant 0 : i32
    return %c0_i32, %c0_i32_0 : i32, i32
  }
  func.func @transform_4(%arg0: i32) -> (i32, i32) {
    %c0_i32 = arith.constant 0 : i32
    %c0_i32_0 = arith.constant 0 : i32
    %c0_i32_1 = arith.constant 0 : i32
    return %c0_i32, %c0_i32_0 : i32, i32
  }
  func.func @transform_5(%arg0: i32) -> (i32, i32) {
    %c0_i32 = arith.constant 0 : i32
    %c0_i32_0 = arith.constant 0 : i32
    return %c0_i32, %arg0 : i32, i32
  }
}

</mosaic_0001>

<llo_original>
// kernel: tpu_custom_call.1
$region0: #{tpu_custom_call.1}
  #allocation0 [shape = 'u32[]', space=smem, size = 0x4, offset = 0x4, fixed_abs, tag = 'smem constant byte address 0x4 - core index']
  #allocation1 [shape = 'u32[144,128]{1,0:T(1,128)}', space=vmem, size = 0x12000, scoped, tag = 'internal scratch']
  #allocation2 [shape = 'f32[1,1]{1,0:T(1,128)S(6)}', space=smem, size = 0x200, scoped, tag = 'scoped memory for tpu_custom_call.1']
  %s0 = inlined_call_operand.vmem [shape: f32[128,34], index: 0, kind: input, shape index: {}]
  %s1 = inlined_call_operand.vmem [shape: f32[1,128], index: 1, kind: input, shape index: {}]
  %s2 = inlined_call_operand.vmem [shape: f32[64,34], index: 2, kind: input, shape index: {}]
  %s3 = inlined_call_operand.vmem [shape: f32[1,64], index: 3, kind: input, shape index: {}]
  %s4 = inlined_call_operand.<no memory space> [shape: f32[1,1], index: 4, kind: input, shape index: {}]
  %s5 = inlined_call_operand.hbm [shape: f32[1,128], index: 5, kind: output, shape index: {}]
  %s6 = sld [smem:[#allocation0]]
  $region30: #{tpu_custom_call.1} parent=0
    _
  %s8 = ssub.s32 1, %s6
  %s9 = scalar_select 0, %s8, %s6
  %10 = sst [smem:[#allocation2]] %s4
  $region1: #{tpu_custom_call.1} parent=0
    #allocation3 [shape = 'u8[512]{0}', space=vmem, size = 0x400, scoped, tag = 'output window, operand 0, single buffered']
    #allocation4 [shape = 's32[1]{0}', space=sflag, size = 0x4, scoped, tag = 'scoped memory for tpu_custom_call.1']
    %11 = vsyncpa [#allocation4], 0
    // Predicated region
    $region2: #{tpu_custom_call.1} parent=1 // pred_check
      _
    $region3: #{tpu_custom_call.1} parent=1 // pred_check_branch
      %13 = sbr.rel (0) target = $region5
    $region4: #{tpu_custom_call.1} parent=1 // pred_region
      _
    $region5: #{tpu_custom_call.1} parent=1 // pred_fallthru
      _
    // Predicated region
    $region6: #{tpu_custom_call.1} parent=1 // pred_check
      _
    $region7: #{tpu_custom_call.1} parent=1 // pred_check_branch
      %15 = sbr.rel (0) target = $region9
    $region8: #{tpu_custom_call.1} parent=1 // pred_region
      _
    $region9: #{tpu_custom_call.1} parent=1 // pred_fallthru
      _
    // Predicated region
    $region10: #{tpu_custom_call.1} parent=1 // pred_check
      _
    $region11: #{tpu_custom_call.1} parent=1 // pred_check_branch
      %17 = sbr.rel (0) target = $region13
    $region12: #{tpu_custom_call.1} parent=1 // pred_region
      _
    $region13: #{tpu_custom_call.1} parent=1 // pred_fallthru
      _
    // Predicated region
    $region14: #{tpu_custom_call.1} parent=1 // pred_check
      _
    $region15: #{tpu_custom_call.1} parent=1 // pred_check_branch
      %19 = sbr.rel (0) target = $region17
    $region16: #{tpu_custom_call.1} parent=1 // pred_region
      _
    $region17: #{tpu_custom_call.1} parent=1 // pred_fallthru
      _
    // Predicated region
    $region18: #{tpu_custom_call.1} parent=1 // pred_check
      _
    $region19: #{tpu_custom_call.1} parent=1 // pred_check_branch
      %21 = sbr.rel (0) target = $region21
    $region20: #{tpu_custom_call.1} parent=1 // pred_region
      _
    $region21: #{tpu_custom_call.1} parent=1 // pred_fallthru
      _
    %v22 = vld [vmem:[%s0] sm:$0xff]
    %v23 = vld [vmem:[%s0 + $0x8] sm:$0xff]
    %v24 = vld [vmem:[%s0 + $0x10] sm:$0xff]
    %v25 = vld [vmem:[%s0 + $0x18] sm:$0xff]
    %v26 = vld [vmem:[%s0 + $0x20] sm:$0xff]
    %v27 = vld [vmem:[%s0 + $0x28] sm:$0xff]
    %v28 = vld [vmem:[%s0 + $0x30] sm:$0xff]
    %v29 = vld [vmem:[%s0 + $0x38] sm:$0xff]
    %v30 = vld [vmem:[%s0 + $0x40] sm:$0xff]
    %v31 = vld [vmem:[%s0 + $0x48] sm:$0xff]
    %v32 = vld [vmem:[%s0 + $0x50] sm:$0xff]
    %v33 = vld [vmem:[%s0 + $0x58] sm:$0xff]
    %v34 = vld [vmem:[%s0 + $0x60] sm:$0xff]
    %v35 = vld [vmem:[%s0 + $0x68] sm:$0xff]
    %v36 = vld [vmem:[%s0 + $0x70] sm:$0xff]
    %v37 = vld [vmem:[%s0 + $0x78] sm:$0xff]
    %v38 = vld [vmem:[%s1] sm:$0x1]
    %v39 = vld [vmem:[%s2] sm:$0xff]
    %v40 = vld [vmem:[%s2 + $0x8] sm:$0xff]
    %v41 = vld [vmem:[%s2 + $0x10] sm:$0xff]
    %v42 = vld [vmem:[%s2 + $0x18] sm:$0xff]
    %v43 = vld [vmem:[%s2 + $0x20] sm:$0xff]
    %v44 = vld [vmem:[%s2 + $0x28] sm:$0xff]
    %v45 = vld [vmem:[%s2 + $0x30] sm:$0xff]
    %v46 = vld [vmem:[%s2 + $0x38] sm:$0xff]
    %v47 = vld [vmem:[%s3] sm:$0x1]
    %s48 = sld [smem:[#allocation2]]
    %vm49 = vcmask 277504
    %v51 = vsel %vm49, %v39, 0
    %v54 = vsel %vm49, %v40, 0
    %v57 = vsel %vm49, %v41, 0
    %v60 = vsel %vm49, %v42, 0
    %v63 = vsel %vm49, %v43, 0
    %v66 = vsel %vm49, %v44, 0
    %v69 = vsel %vm49, %v45, 0
    %v72 = vsel %vm49, %v46, 0
    %v75 = vsel %vm49, %v22, 0
    %v78 = vsel %vm49, %v23, 0
    %v81 = vsel %vm49, %v24, 0
    %v84 = vsel %vm49, %v25, 0
    %v87 = vsel %vm49, %v26, 0
    %v90 = vsel %vm49, %v27, 0
    %v93 = vsel %vm49, %v28, 0
    %v96 = vsel %vm49, %v29, 0
    %v99 = vsel %vm49, %v30, 0
    %v102 = vsel %vm49, %v31, 0
    %v105 = vsel %vm49, %v32, 0
    %v108 = vsel %vm49, %v33, 0
    %v111 = vsel %vm49, %v34, 0
    %v114 = vsel %vm49, %v35, 0
    %v117 = vsel %vm49, %v36, 0
    %v120 = vsel %vm49, %v37, 0
    %122 = vmatprep.subr.mxu0 0.0
    %123 = vmatpush1.xpose.msra.mxu0 %v120
    %124 = vmatprep.subr.mxu0 0.0
    %125 = vmatpush1.xpose.msra.mxu0 %v117
    %126 = vmatprep.subr.mxu0 0.0
    %127 = vmatpush1.xpose.msra.mxu0 %v114
    %128 = vmatprep.subr.mxu0 0.0
    %129 = vmatpush1.xpose.msra.mxu0 %v111
    %130 = vmatprep.subr.mxu0 0.0
    %131 = vmatpush1.xpose.msra.mxu0 %v108
    %132 = vmatprep.subr.mxu0 0.0
    %133 = vmatpush1.xpose.msra.mxu0 %v105
    %134 = vmatprep.subr.mxu0 0.0
    %135 = vmatpush1.xpose.msra.mxu0 %v102
    %136 = vmatprep.subr.mxu0 0.0
    %137 = vmatpush1.xpose.msra.mxu0 %v99
    %138 = vmatprep.subr.mxu0 0.0
    %139 = vmatpush1.xpose.msra.mxu0 %v96
    %140 = vmatprep.subr.mxu0 0.0
    %141 = vmatpush1.xpose.msra.mxu0 %v93
    %142 = vmatprep.subr.mxu0 0.0
    %143 = vmatpush1.xpose.msra.mxu0 %v90
    %144 = vmatprep.subr.mxu0 0.0
    %145 = vmatpush1.xpose.msra.mxu0 %v87
    %146 = vmatprep.subr.mxu0 0.0
    %147 = vmatpush1.xpose.msra.mxu0 %v84
    %148 = vmatprep.subr.mxu0 0.0
    %149 = vmatpush1.xpose.msra.mxu0 %v81
    %150 = vmatprep.subr.mxu0 0.0
    %151 = vmatpush1.xpose.msra.mxu0 %v78
    %152 = vmatprep.subr.mxu0 0.0
    %153 = vmatpush1.xpose.msra.mxu0 %v75
    %154 = vmatprep.subr.mxu0 0.0
    %155 = vmatpush2.xpose.msra.mxu0 0.0
    %156 = vmatprep.subr.mxu0 0.0
    %157 = vmatpush2.xpose.msra.mxu0 0.0
    %158 = vmatprep.subr.mxu0 0.0
    %159 = vmatpush2.xpose.msra.mxu0 0.0
    %160 = vmatprep.subr.mxu0 0.0
    %161 = vmatpush2.xpose.msra.mxu0 0.0
    %162 = vmatprep.subr.mxu0 0.0
    %163 = vmatpush2.xpose.msra.mxu0 0.0
    %164 = vmatprep.subr.mxu0 0.0
    %165 = vmatpush2.xpose.msra.mxu0 0.0
    %166 = vmatprep.subr.mxu0 0.0
    %167 = vmatpush2.xpose.msra.mxu0 0.0
    %168 = vmatprep.subr.mxu0 0.0
    %169 = vmatpush2.xpose.msra.mxu0 0.0
    %170 = vmatprep.subr.mxu0 0.0
    %171 = vmatpush2.xpose.msra.mxu0 0.0
    %172 = vmatprep.subr.mxu0 0.0
    %173 = vmatpush2.xpose.msra.mxu0 0.0
    %174 = vmatprep.subr.mxu0 0.0
    %175 = vmatpush2.xpose.msra.mxu0 0.0
    %176 = vmatprep.subr.mxu0 0.0
    %177 = vmatpush2.xpose.msra.mxu0 0.0
    %178 = vmatprep.subr.mxu0 0.0
    %179 = vmatpush2.xpose.msra.mxu0 0.0
    %180 = vmatprep.subr.mxu0 0.0
    %181 = vmatpush2.xpose.msra.mxu0 0.0
    %182 = vmatprep.subr.mxu0 0.0
    %183 = vmatpush2.xpose.msra.mxu0 0.0
    %184 = vmatprep.subr.mxu0 0.0
    %185 = vmatpush2.xpose.msra.mxu0 0.0
    %186 = vmatprep.mubr.f32.mxu0 0.0
    %187 = vmatmul.mubr.f32.gmra.mxu0 %v51
    %v188 = vpop.f32.mrf.mxu0
    %v189 = vadd.f32 0.0, %v188
    %v190 = vpop.f32.mrf.mxu0
    %191 = vmatprep.mubr.f32.mxu0 0.0
    %192 = vmatmul.mubr.f32.gmra.mxu0 %v54
    %v193 = vpop.f32.mrf.mxu0
    %v194 = vadd.f32 0.0, %v193
    %v195 = vpop.f32.mrf.mxu0
    %196 = vmatprep.mubr.f32.mxu0 0.0
    %197 = vmatmul.mubr.f32.gmra.mxu0 %v57
    %v198 = vpop.f32.mrf.mxu0
    %v199 = vadd.f32 0.0, %v198
    %v200 = vpop.f32.mrf.mxu0
    %201 = vmatprep.mubr.f32.mxu0 0.0
    %202 = vmatmul.mubr.f32.gmra.mxu0 %v60
    %v203 = vpop.f32.mrf.mxu0
    %v204 = vadd.f32 0.0, %v203
    %v205 = vpop.f32.mrf.mxu0
    %206 = vmatprep.mubr.f32.mxu0 0.0
    %207 = vmatmul.mubr.f32.gmra.mxu0 %v63
    %v208 = vpop.f32.mrf.mxu0
    %v209 = vadd.f32 0.0, %v208
    %v210 = vpop.f32.mrf.mxu0
    %211 = vmatprep.mubr.f32.mxu0 0.0
    %212 = vmatmul.mubr.f32.gmra.mxu0 %v66
    %v213 = vpop.f32.mrf.mxu0
    %v214 = vadd.f32 0.0, %v213
    %v215 = vpop.f32.mrf.mxu0
    %216 = vmatprep.mubr.f32.mxu0 0.0
    %217 = vmatmul.mubr.f32.gmra.mxu0 %v69
    %v218 = vpop.f32.mrf.mxu0
    %v219 = vadd.f32 0.0, %v218
    %v220 = vpop.f32.mrf.mxu0
    %221 = vmatprep.mubr.f32.mxu0 0.0
    %222 = vmatmul.mubr.f32.gmra.mxu0 %v72
    %v223 = vpop.f32.mrf.mxu0
    %v224 = vadd.f32 0.0, %v223
    %v225 = vpop.f32.mrf.mxu0
    %226 = vdwg.mxu0
    %v227 = vmax.f32 %v189, 0.0
    %v228 = vmax.f32 %v194, 0.0
    %v229 = vmax.f32 %v199, 0.0
    %v230 = vmax.f32 %v204, 0.0
    %v231 = vmax.f32 %v209, 0.0
    %v232 = vmax.f32 %v214, 0.0
    %v233 = vmax.f32 %v219, 0.0
    %v234 = vmax.f32 %v224, 0.0
    %v235 = vadd.f32 %v227, 1.0
    %v236 = vadd.f32 %v228, 1.0
    %v237 = vadd.f32 %v229, 1.0
    %v238 = vadd.f32 %v230, 1.0
    %v239 = vadd.f32 %v231, 1.0
    %v240 = vadd.f32 %v232, 1.0
    %v241 = vadd.f32 %v233, 1.0
    %v242 = vadd.f32 %v234, 1.0
    %v243 = vrsqrt.pop %v235
    %v244 = vmul.f32 %v235, %v243
    %vm245 = vcmp.eq.f32.partialorder %v235, inf
    %v246 = vsel %vm245, %v235, %v244
    %vm247 = vcmp.eq.f32.partialorder %v235, 0.0
    %v248 = vand.u32 %v235, 2147483648
    %v249 = vsel %vm247, %v248, %v246
    %v250 = vrsqrt.pop %v236
    %v251 = vmul.f32 %v236, %v250
    %vm252 = vcmp.eq.f32.partialorder %v236, inf
    %v253 = vsel %vm252, %v236, %v251
    %vm254 = vcmp.eq.f32.partialorder %v236, 0.0
    %v255 = vand.u32 %v236, 2147483648
    %v256 = vsel %vm254, %v255, %v253
    %v257 = vrsqrt.pop %v237
    %v258 = vmul.f32 %v237, %v257
    %vm259 = vcmp.eq.f32.partialorder %v237, inf
    %v260 = vsel %vm259, %v237, %v258
    %vm261 = vcmp.eq.f32.partialorder %v237, 0.0
    %v262 = vand.u32 %v237, 2147483648
    %v263 = vsel %vm261, %v262, %v260
    %v264 = vrsqrt.pop %v238
    %v265 = vmul.f32 %v238, %v264
    %vm266 = vcmp.eq.f32.partialorder %v238, inf
    %v267 = vsel %vm266, %v238, %v265
    %vm268 = vcmp.eq.f32.partialorder %v238, 0.0
    %v269 = vand.u32 %v238, 2147483648
    %v270 = vsel %vm268, %v269, %v267
    %v271 = vrsqrt.pop %v239
    %v272 = vmul.f32 %v239, %v271
    %vm273 = vcmp.eq.f32.partialorder %v239, inf
    %v274 = vsel %vm273, %v239, %v272
    %vm275 = vcmp.eq.f32.partialorder %v239, 0.0
    %v276 = vand.u32 %v239, 2147483648
    %v277 = vsel %vm275, %v276, %v274
    %v278 = vrsqrt.pop %v240
    %v279 = vmul.f32 %v240, %v278
    %vm280 = vcmp.eq.f32.partialorder %v240, inf
    %v281 = vsel %vm280, %v240, %v279
    %vm282 = vcmp.eq.f32.partialorder %v240, 0.0
    %v283 = vand.u32 %v240, 2147483648
    %v284 = vsel %vm282, %v283, %v281
    %v285 = vrsqrt.pop %v241
    %v286 = vmul.f32 %v241, %v285
    %vm287 = vcmp.eq.f32.partialorder %v241, inf
    %v288 = vsel %vm287, %v241, %v286
    %vm289 = vcmp.eq.f32.partialorder %v241, 0.0
    %v290 = vand.u32 %v241, 2147483648
    %v291 = vsel %vm289, %v290, %v288
    %v292 = vrsqrt.pop %v242
    %v293 = vmul.f32 %v242, %v292
    %vm294 = vcmp.eq.f32.partialorder %v242, inf
    %v295 = vsel %vm294, %v242, %v293
    %vm296 = vcmp.eq.f32.partialorder %v242, 0.0
    %v297 = vand.u32 %v242, 2147483648
    %v298 = vsel %vm296, %v297, %v295
    %v299 = vstv %s48
    %vm300 = vcmask 523264
    %v302 = vsel %vm300, %v47, 0
    %304 = vmatprep.subr.mxu0 0.0
    %305 = vmatpush1.msra.mxu0 0.0
    %306 = vmatprep.subr.mxu0 0.0
    %307 = vmatpush1.msra.mxu0 0.0
    %308 = vmatprep.subr.mxu0 0.0
    %309 = vmatpush1.msra.mxu0 0.0
    %310 = vmatprep.subr.mxu0 0.0
    %311 = vmatpush1.msra.mxu0 0.0
    %312 = vmatprep.subr.mxu0 0.0
    %313 = vmatpush1.msra.mxu0 0.0
    %314 = vmatprep.subr.mxu0 0.0
    %315 = vmatpush1.msra.mxu0 0.0
    %316 = vmatprep.subr.mxu0 0.0
    %317 = vmatpush1.msra.mxu0 0.0
    %318 = vmatprep.subr.mxu0 0.0
    %319 = vmatpush1.msra.mxu0 0.0
    %320 = vmatprep.subr.mxu0 0.0
    %321 = vmatpush1.msra.mxu0 %v298
    %322 = vmatprep.subr.mxu0 0.0
    %323 = vmatpush1.msra.mxu0 %v291
    %324 = vmatprep.subr.mxu0 0.0
    %325 = vmatpush1.msra.mxu0 %v284
    %326 = vmatprep.subr.mxu0 0.0
    %327 = vmatpush1.msra.mxu0 %v277
    %328 = vmatprep.subr.mxu0 0.0
    %329 = vmatpush1.msra.mxu0 %v270
    %330 = vmatprep.subr.mxu0 0.0
    %331 = vmatpush1.msra.mxu0 %v263
    %332 = vmatprep.subr.mxu0 0.0
    %333 = vmatpush1.msra.mxu0 %v256
    %334 = vmatprep.subr.mxu0 0.0
    %335 = vmatpush1.msra.mxu0 %v249
    %336 = vmatprep.subr.mxu0 0.0
    %337 = vmatpush2.msra.mxu0 0.0
    %338 = vmatprep.subr.mxu0 0.0
    %339 = vmatpush2.msra.mxu0 0.0
    %340 = vmatprep.subr.mxu0 0.0
    %341 = vmatpush2.msra.mxu0 0.0
    %342 = vmatprep.subr.mxu0 0.0
    %343 = vmatpush2.msra.mxu0 0.0
    %344 = vmatprep.subr.mxu0 0.0
    %345 = vmatpush2.msra.mxu0 0.0
    %346 = vmatprep.subr.mxu0 0.0
    %347 = vmatpush2.msra.mxu0 0.0
    %348 = vmatprep.subr.mxu0 0.0
    %349 = vmatpush2.msra.mxu0 0.0
    %350 = vmatprep.subr.mxu0 0.0
    %351 = vmatpush2.msra.mxu0 0.0
    %352 = vmatprep.subr.mxu0 0.0
    %353 = vmatpush2.msra.mxu0 0.0
    %354 = vmatprep.subr.mxu0 0.0
    %355 = vmatpush2.msra.mxu0 0.0
    %356 = vmatprep.subr.mxu0 0.0
    %357 = vmatpush2.msra.mxu0 0.0
    %358 = vmatprep.subr.mxu0 0.0
    %359 = vmatpush2.msra.mxu0 0.0
    %360 = vmatprep.subr.mxu0 0.0
    %361 = vmatpush2.msra.mxu0 0.0
    %362 = vmatprep.subr.mxu0 0.0
    %363 = vmatpush2.msra.mxu0 0.0
    %364 = vmatprep.subr.mxu0 0.0
    %365 = vmatpush2.msra.mxu0 0.0
    %366 = vmatprep.subr.mxu0 0.0
    %367 = vmatpush2.msra.mxu0 0.0
    %368 = vmatprep.mubr.f32.mxu0 0.0
    %369 = vmatmul.mubr.f32.gmra.mxu0 %v302
    %v370 = vpop.f32.mrf.mxu0
    %v371 = vadd.f32 %v299, %v370
    %v372 = vpop.f32.mrf.mxu0
    %373 = vdwg.mxu0
    %v374 = vtanh.pop %v371
    %v375 = vmul.f32 %v38, 0.5
    %v376 = vadd.f32 %v374, %v375
    %377 = vst [vmem:[#allocation3] sm:$0x1] %v376
    // Predicated region
    $region22: #{tpu_custom_call.1} parent=1 // pred_check
      _
    $region23: #{tpu_custom_call.1} parent=1 // pred_check_branch
      %379 = sbr.rel (0) target = $region25
    $region24: #{tpu_custom_call.1} parent=1 // pred_region
      %s381 = ssub.s32 16, 16
      %382 = vsyncadd [#allocation4], %s381
      %s384 = sshll.u32 [#allocation3], 4
      %s385 = int_to_ptr.vmem [resolvable:$true] %s384
      %387 = dma.vmem_to_hbm [thread:$0]  %s385, 16, %s5, [#allocation4]
    $region25: #{tpu_custom_call.1} parent=1 // pred_fallthru
      _
    // Predicated region
    $region26: #{tpu_custom_call.1} parent=1 // pred_check
      _
    $region27: #{tpu_custom_call.1} parent=1 // pred_check_branch
      %389 = sbr.rel (0) target = $region29
    $region28: #{tpu_custom_call.1} parent=1 // pred_region
      %390 = dma.done [#allocation4], 16
    $region29: #{tpu_custom_call.1} parent=1 // pred_fallthru
      _
    %391 = vsyncpa [#allocation4], 1

</llo_original>
